<compile_context>
chip_gen: v7x
topology: tpu7x:2x2x1
jax: 0.10.0
libtpu: 0.0.40
codegen_flags: <defaults>
</compile_context>

<pallas_src>
import math

import jax
import jax.numpy as jnp
from jax.experimental import pallas as pl
from jax.experimental.pallas import tpu as pltpu


def _mlp_kernel(w_ref, b_ref, x_ref, o_ref):
    # w_ref / b_ref: (1, 1) f32 scalars in SMEM; x_ref / o_ref: (block_rows, lane_w) VMEM tiles.
    w = w_ref[0, 0]
    b = b_ref[0, 0]
    o_ref[...] = (x_ref[...].astype(jnp.float32) * w + b).astype(o_ref.dtype)


def _round_up(a: int, m: int) -> int:
    return ((a + m - 1) // m) * m


def _tensorcores_per_chip() -> int:
    """Best-effort detection of TensorCores behind one JAX device (megacore)."""
    try:
        kind = jax.devices()[0].device_kind.lower()
    except Exception:
        return 1
    # v4 / v7x expose 2 TensorCores per device; v5e / v6e are single-TC.
    return 2 if ("v7" in kind or "v4" in kind) else 1


def _pick_block_rows(rows: int, target_rows: int, sub: int, num_tc: int) -> int:
    """Rows per block: multiple of `sub` (or the full `rows`), ~target-tile sized.

    On 2-TensorCore chips, additionally aim for an even (>= 2) grid-step count
    so dimension_semantics=("parallel",) gives both cores equal work.
    """
    if num_tc < 2 or rows <= 2 * sub:
        return rows if target_rows >= rows else target_rows
    base = max(2, pl.cdiv(rows, target_rows))
    base += base % 2
    fallback = None
    for steps in range(base, base + 9, 2):
        br = max(sub, _round_up(pl.cdiv(rows, steps), sub))
        if pl.cdiv(rows, br) % 2 == 0:
            return br
        if fallback is None:
            fallback = br
    return fallback  # >= 2 steps guaranteed; odd count only in rare shapes.


def mlp_forward(x, weight, bias):
    """y = x * weight + bias, elementwise, for an arbitrarily shaped x.

    Equivalent to the PyTorch MLP.forward (Linear(1,1) on an unsqueezed last dim).
    """
    orig_shape = x.shape
    dtype = x.dtype
    total = math.prod(orig_shape) if orig_shape else 1
    if total == 0:
        return x

    itemsize = jnp.dtype(dtype).itemsize
    sub = max(8, 32 // itemsize)  # sublane packing: 8 (f32), 16 (bf16), 32 (int8/fp8)

    # Lane-dense slab width; prefer one that divides `total` exactly so the
    # reshape is free and no pad / tail-slice copies are needed.
    lane_w = None
    for cand in (512, 256, 128):
        if total % cand == 0:
            lane_w = cand
            break
    padded_total = total
    if lane_w is None:
        lane_w = 512
        padded_total = _round_up(total, lane_w)

    rows = padded_total // lane_w
    flat = x.reshape(-1)
    if padded_total != total:
        # Sub-lane tail only (< lane_w elements); unavoidable copy for flat
        # sizes that are not a multiple of 128.
        flat = jnp.pad(flat, (0, padded_total - total))
    slab = flat.reshape(rows, lane_w)

    num_tc = _tensorcores_per_chip()
    row_bytes = lane_w * itemsize

    if total * itemsize <= (1 << 20):
        # Small input: one block covering the whole slab (no alignment
        # constraints when block_shape == array shape), single grid step.
        block_rows = rows
    else:
        # Large input: ~2 MiB tiles (1-TC chips) / ~4 MiB tiles (2-TC chips).
        tile_bytes = (4 << 20) if num_tc >= 2 else (2 << 20)
        target_rows = max(sub, (tile_bytes // row_bytes) // sub * sub)
        block_rows = _pick_block_rows(rows, target_rows, sub, num_tc)

    grid = (pl.cdiv(rows, block_rows),)

    w2d = jnp.asarray(weight, dtype=jnp.float32).reshape(1, 1)
    b2d = jnp.asarray(bias, dtype=jnp.float32).reshape(1, 1)

    out_slab = pl.pallas_call(
        _mlp_kernel,
        out_shape=jax.ShapeDtypeStruct((rows, lane_w), dtype),
        grid=grid,
        in_specs=[
            pl.BlockSpec((1, 1), lambda i: (0, 0), memory_space=pltpu.SMEM),
            pl.BlockSpec((1, 1), lambda i: (0, 0), memory_space=pltpu.SMEM),
            pl.BlockSpec((block_rows, lane_w), lambda i: (i, 0)),
        ],
        out_specs=pl.BlockSpec((block_rows, lane_w), lambda i: (i, 0)),
        compiler_params=pltpu.CompilerParams(
            dimension_semantics=("parallel",),
        ),
    )(w2d, b2d, slab)

    out_flat = out_slab.reshape(-1)
    if padded_total != total:
        out_flat = out_flat[:total]
    return out_flat.reshape(orig_shape)


if __name__ == "__main__":
    key = jax.random.PRNGKey(0)
    k_w, k_b, k1, k2, k3, k4 = jax.random.split(key, 6)

    # Deterministic init matching nn.Linear(1, 1): uniform in [-1, 1].
    weight = jax.random.uniform(k_w, (1, 1), minval=-1.0, maxval=1.0, dtype=jnp.float32)
    bias = jax.random.uniform(k_b, (1,), minval=-1.0, maxval=1.0, dtype=jnp.float32)
    w = weight[0, 0]
    b = bias[0]

    def ref_fn(x):
        return (x.astype(jnp.float32) * w + b).astype(x.dtype)

    # 1) Small module-style input: single-block path, lane-divisible -> no pad.
    x_small = jax.random.normal(k1, (2, 4, 16, 16), dtype=jnp.float32)
    out = jax.block_until_ready(mlp_forward(x_small, w, b))
    assert out.shape == x_small.shape and out.dtype == x_small.dtype
    assert jnp.allclose(out, ref_fn(x_small), atol=1e-6, rtol=1e-6)

    # 2) Mid-size input: multi-step grid with a ragged final block, zero pad/slice.
    x_big = jax.random.normal(k2, (1024, 600), dtype=jnp.float32)
    out = jax.block_until_ready(mlp_forward(x_big, w, b))
    assert out.shape == x_big.shape and out.dtype == x_big.dtype
    assert jnp.allclose(out, ref_fn(x_big), atol=1e-6, rtol=1e-6)

    # 3) Flat size not a multiple of 128: exercises the sub-lane-only pad path.
    x_odd = jax.random.normal(k3, (173, 37), dtype=jnp.float32)
    out = jax.block_until_ready(mlp_forward(x_odd, w, b))
    assert out.shape == x_odd.shape and out.dtype == x_odd.dtype
    assert jnp.allclose(out, ref_fn(x_odd), atol=1e-6, rtol=1e-6)

    # 4) bf16 input: f32 compute, bf16 store (sublane packing handled).
    x_bf16 = jax.random.normal(k4, (64, 384), dtype=jnp.float32).astype(jnp.bfloat16)
    out = jax.block_until_ready(mlp_forward(x_bf16, w, b))
    assert out.shape == x_bf16.shape and out.dtype == x_bf16.dtype
    assert jnp.allclose(out.astype(jnp.float32), ref_fn(x_bf16).astype(jnp.float32),
                        atol=2e-2, rtol=2e-2)

    print("KERNEL_OK")
</pallas_src>

<mosaic_0001>
module attributes {stable_mosaic.version = 11 : i64} {
  func.func @_mlp_kernel(%arg0: i32, %arg1: memref<1x1xf32, #tpu.memory_space<smem>>, %arg2: memref<1x1xf32, #tpu.memory_space<smem>>, %arg3: memref<4x512xf32, #tpu.memory_space<vmem>>, %arg4: memref<4x512xf32, #tpu.memory_space<vmem>>) attributes {dimension_semantics = [#tpu.dimension_semantics<parallel>], iteration_bounds = array<i64: 1>, scalar_prefetch = 0 : i64, scratch_operands = 0 : i64, tpu.core_type = #tpu.core_type<tc>, window_params = [{transform_indices = @transform_0, window_bounds = array<i64: 1, 1>}, {transform_indices = @transform_1, window_bounds = array<i64: 1, 1>}, {transform_indices = @transform_2, window_bounds = array<i64: 4, 512>}, {transform_indices = @transform_3, window_bounds = array<i64: 4, 512>}]} {
    %c0 = arith.constant 0 : index
    %c0_0 = arith.constant 0 : index
    %0 = memref.load %arg1[%c0, %c0_0] : memref<1x1xf32, #tpu.memory_space<smem>>
    %c0_1 = arith.constant 0 : index
    %c0_2 = arith.constant 0 : index
    %1 = memref.load %arg2[%c0_1, %c0_2] : memref<1x1xf32, #tpu.memory_space<smem>>
    %c0_3 = arith.constant 0 : index
    %c0_4 = arith.constant 0 : index
    %2 = vector.load %arg3[%c0_3, %c0_4] : memref<4x512xf32, #tpu.memory_space<vmem>>, vector<4x512xf32>
    %3 = vector.broadcast %0 : f32 to vector<4x512xf32>
    %4 = arith.mulf %2, %3 : vector<4x512xf32>
    %5 = vector.broadcast %1 : f32 to vector<4x512xf32>
    %6 = arith.addf %4, %5 : vector<4x512xf32>
    %c0_5 = arith.constant 0 : index
    %c0_6 = arith.constant 0 : index
    %7 = vector.load %arg4[%c0_5, %c0_6] : memref<4x512xf32, #tpu.memory_space<vmem>>, vector<4x512xf32>
    tpu.vector_store %arg4[%c0_5, %c0_6], %6 {strides = array<i32>} : memref<4x512xf32, #tpu.memory_space<vmem>>, vector<4x512xf32>,
    return
  }
  func.func @transform_0(%arg0: i32) -> (i32, i32) {
    %c0_i32 = arith.constant 0 : i32
    %c0_i32_0 = arith.constant 0 : i32
    %c0_i32_1 = arith.constant 0 : i32
    return %c0_i32, %c0_i32_0 : i32, i32
  }
  func.func @transform_1(%arg0: i32) -> (i32, i32) {
    %c0_i32 = arith.constant 0 : i32
    %c0_i32_0 = arith.constant 0 : i32
    %c0_i32_1 = arith.constant 0 : i32
    return %c0_i32, %c0_i32_0 : i32, i32
  }
  func.func @transform_2(%arg0: i32) -> (i32, i32) {
    %c0_i32 = arith.constant 0 : i32
    %c0_i32_0 = arith.constant 0 : i32
    return %arg0, %c0_i32 : i32, i32
  }
  func.func @transform_3(%arg0: i32) -> (i32, i32) {
    %c0_i32 = arith.constant 0 : i32
    %c0_i32_0 = arith.constant 0 : i32
    return %arg0, %c0_i32 : i32, i32
  }
}

</mosaic_0001>

<llo_original>
// kernel: tpu_custom_call.1
$region0: #{tpu_custom_call.1}
  #allocation0 [shape = 'u32[]', space=smem, size = 0x4, offset = 0x4, fixed_abs, tag = 'smem constant byte address 0x4 - core index']
  #allocation1 [shape = 'u32[144,128]{1,0:T(1,128)}', space=vmem, size = 0x12000, scoped, tag = 'internal scratch']
  #allocation2 [shape = 'f32[1,1]{1,0:T(1,128)S(6)}', space=smem, size = 0x200, scoped, tag = 'scoped memory for tpu_custom_call.1']
  #allocation3 [shape = 'f32[1,1]{1,0:T(1,128)S(6)}', space=smem, size = 0x200, scoped, tag = 'scoped memory for tpu_custom_call.1']
  %s0 = inlined_call_operand.<no memory space> [shape: f32[1,1], index: 0, kind: input, shape index: {}]
  %s1 = inlined_call_operand.<no memory space> [shape: f32[1,1], index: 1, kind: input, shape index: {}]
  %s2 = inlined_call_operand.hbm [shape: f32[4,512], index: 2, kind: input, shape index: {}]
  %s3 = inlined_call_operand.hbm [shape: f32[4,512], index: 3, kind: output, shape index: {}]
  %s4 = sld [smem:[#allocation0]]
  $region26: #{tpu_custom_call.1} parent=0
    _
  %s6 = ssub.s32 1, %s4
  %s7 = scalar_select 0, %s6, %s4
  %8 = sst [smem:[#allocation2]] %s0
  %9 = sst [smem:[#allocation3]] %s1
  $region1: #{tpu_custom_call.1} parent=0
    #allocation4 [shape = 'u8[8192]{0}', space=vmem, size = 0x2000, scoped, tag = 'input window, operand 2, single buffered']
    #allocation5 [shape = 's32[1]{0}', space=sflag, size = 0x4, scoped, tag = 'scoped memory for tpu_custom_call.1']
    #allocation6 [shape = 's32[1]{0}', space=sflag, size = 0x4, scoped, tag = 'scoped memory for tpu_custom_call.1']
    #allocation7 [shape = 'u8[8192]{0}', space=vmem, size = 0x2000, scoped, tag = 'output window, operand 0, single buffered']
    %10 = vsyncpa [#allocation5], 0
    %11 = vsyncpa [#allocation6], 0
    // Predicated region
    $region2: #{tpu_custom_call.1} parent=1 // pred_check
      _
    $region3: #{tpu_custom_call.1} parent=1 // pred_check_branch
      %13 = sbr.rel (0) target = $region5
    $region4: #{tpu_custom_call.1} parent=1 // pred_region
      _
    $region5: #{tpu_custom_call.1} parent=1 // pred_fallthru
      _
    // Predicated region
    $region6: #{tpu_custom_call.1} parent=1 // pred_check
      _
    $region7: #{tpu_custom_call.1} parent=1 // pred_check_branch
      %15 = sbr.rel (0) target = $region9
    $region8: #{tpu_custom_call.1} parent=1 // pred_region
      _
    $region9: #{tpu_custom_call.1} parent=1 // pred_fallthru
      _
    // Predicated region
    $region10: #{tpu_custom_call.1} parent=1 // pred_check
      _
    $region11: #{tpu_custom_call.1} parent=1 // pred_check_branch
      %17 = sbr.rel (0) target = $region13
    $region12: #{tpu_custom_call.1} parent=1 // pred_region
      %s19 = ssub.s32 256, 256
      %20 = vsyncadd [#allocation5], %s19
      %s22 = sshll.u32 [#allocation4], 4
      %s23 = int_to_ptr.vmem [resolvable:$true] %s22
      %25 = dma.hbm_to_vmem [thread:$0]  %s2, 256, %s23, [#allocation5]
    $region13: #{tpu_custom_call.1} parent=1 // pred_fallthru
      _
    // Predicated region
    $region14: #{tpu_custom_call.1} parent=1 // pred_check
      _
    $region15: #{tpu_custom_call.1} parent=1 // pred_check_branch
      %27 = sbr.rel (0) target = $region17
    $region16: #{tpu_custom_call.1} parent=1 // pred_region
      %28 = dma.done [#allocation5], 256
    $region17: #{tpu_custom_call.1} parent=1 // pred_fallthru
      _
    %s29 = sld [smem:[#allocation2]]
    %s30 = sld [smem:[#allocation3]]
    %v31 = vld [vmem:[#allocation4] sm:$0xff]
    %v32 = vld [vmem:[#allocation4 + $0x8] sm:$0xff]
    %v33 = vstv %s29
    %v34 = vmul.f32 %v31, %v33
    %v35 = vmul.f32 %v32, %v33
    %v36 = vstv %s30
    %v37 = vadd.f32 %v34, %v36
    %v38 = vadd.f32 %v35, %v36
    %39 = vst [vmem:[#allocation7] sm:$0xff] %v37
    %40 = vst [vmem:[#allocation7 + $0x8] sm:$0xff] %v38
    // Predicated region
    $region18: #{tpu_custom_call.1} parent=1 // pred_check
      _
    $region19: #{tpu_custom_call.1} parent=1 // pred_check_branch
      %42 = sbr.rel (0) target = $region21
    $region20: #{tpu_custom_call.1} parent=1 // pred_region
      %s44 = ssub.s32 256, 256
      %45 = vsyncadd [#allocation6], %s44
      %s47 = sshll.u32 [#allocation7], 4
      %s48 = int_to_ptr.vmem [resolvable:$true] %s47
      %50 = dma.vmem_to_hbm [thread:$0]  %s48, 256, %s3, [#allocation6]
    $region21: #{tpu_custom_call.1} parent=1 // pred_fallthru
      _
    // Predicated region
    $region22: #{tpu_custom_call.1} parent=1 // pred_check
      _
    $region23: #{tpu_custom_call.1} parent=1 // pred_check_branch
      %52 = sbr.rel (0) target = $region25
    $region24: #{tpu_custom_call.1} parent=1 // pred_region
      %53 = dma.done [#allocation6], 256
    $region25: #{tpu_custom_call.1} parent=1 // pred_fallthru
      _
    %54 = vsyncpa [#allocation5], 1
    %55 = vsyncpa [#allocation6], 1

</llo_original>
